<compile_context>
chip_gen: v7x
topology: tpu7x:2x2x1
jax: 0.10.0
libtpu: 0.0.40
codegen_flags: <defaults>
</compile_context>

<pallas_src>
import jax
import jax.numpy as jnp
from jax.experimental import pallas as pl
from jax.experimental.pallas import tpu as pltpu


# Smallest normal f32.  TPU flushes denormals, so the module's literal 1e-40
# becomes 0 and log(1 - u^2 + 0) = -inf once tanh saturates; the smallest
# normal keeps the saturation sentinel finite (~-87.3 vs PyTorch's ~-92.1) and
# is negligible everywhere else.
_EPS = float(jnp.finfo(jnp.float32).tiny)


# ---------------------------------------------------------------------------
# Kernels (compute in f32 regardless of I/O dtype)
# ---------------------------------------------------------------------------
def _tanh_direct_kernel(x_ref, u_ref, ld_ref):
    x = x_ref[...].astype(jnp.float32)
    u = jnp.tanh(x)                                                    # EUP
    ld = jnp.sum(jnp.log(1.0 - u * u + _EPS), axis=-1, keepdims=True)  # EUP + XLU
    u_ref[...] = u.astype(u_ref.dtype)
    ld_ref[...] = ld.astype(ld_ref.dtype)


def _tanh_inverse_kernel(x_ref, y_ref, ld_ref):
    x = x_ref[...].astype(jnp.float32)
    # atanh(x) = 0.5*(log1p(x) - log1p(-x));  log(1 - x^2) = log1p(x) + log1p(-x)
    # -> no divide, and the two logs are shared by output and log-det
    #    (2 EUP transcendentals per element instead of 3).
    a = jnp.log1p(x)
    b = jnp.log1p(-x)
    y = 0.5 * (a - b)
    ld = -jnp.sum(a + b, axis=-1, keepdims=True)
    y_ref[...] = y.astype(y_ref.dtype)
    ld_ref[...] = ld.astype(ld_ref.dtype)


# ---------------------------------------------------------------------------
# Block sizing
# ---------------------------------------------------------------------------
def _round_down8(n):
    return max(8, (n // 8) * 8)


def _pick_block_rows(B, D, itemsize):
    # ~2 MiB per input block (measured sweet spot for HBM-bound elementwise
    # kernels), but keep >= ~8 grid steps when the batch affords it so the
    # pipeline has depth and the "parallel" axis feeds both v7x TensorCores.
    tb = _round_down8((2 << 20) // max(1, D * itemsize))
    tb = min(tb, _round_down8(pl.cdiv(B, 8)))
    return tb


# ---------------------------------------------------------------------------
# Wrapper
# ---------------------------------------------------------------------------
def tanh_flow(inputs, mode="direct", *, gridless_max_bytes=1 << 20):
    """Pallas TPU implementation of the Tanh flow layer forward pass.

    inputs: [..., D]  (leading dims flattened into a batch internally)
    mode:   "direct" or anything else for the inverse branch
    returns (out [..., D] in inputs.dtype, log_det [..., 1] in float32)
    """
    kernel = _tanh_direct_kernel if mode == "direct" else _tanh_inverse_kernel

    orig_shape = inputs.shape
    D = orig_shape[-1]
    x2 = inputs.reshape(-1, D)
    B = x2.shape[0]
    out_dtype = inputs.dtype
    itemsize = jnp.dtype(out_dtype).itemsize
    total_bytes = B * D * itemsize

    cost = pl.CostEstimate(
        flops=5 * B * D,
        transcendentals=2 * B * D,
        bytes_accessed=2 * total_bytes + B * 4,
    )
    out_shapes = (jax.ShapeDtypeStruct((B, D), out_dtype),
                  jax.ShapeDtypeStruct((B, 1), jnp.float32))

    if total_bytes <= gridless_max_bytes:
        # Latency-bound case: single invocation, whole-array VMEM blocks,
        # no per-step pipeline overhead.
        y2, ld2 = pl.pallas_call(
            kernel, out_shape=out_shapes, cost_estimate=cost)(x2)
    else:
        # HBM-bound case: tile the batch rows; every block is independent so
        # the grid axis is "parallel" (megacore shards it on v7x).  pl.cdiv
        # handles a ragged last block (OOB reads are junk rows whose writes
        # are dropped), so no wrapper pad/slice and no extra HBM traffic.
        # TODO(synk): for D < 128 the (tb, D) layout is lane-sparse; a
        # transposed (D, B) layout would be denser but costs a wrapper
        # transpose (an extra full HBM pass), so it is not done here.
        tb = _pick_block_rows(B, D, itemsize)
        grid = (pl.cdiv(B, tb),)
        block_bytes = tb * D * itemsize
        vmem_limit = int(min(64 << 20, max(32 << 20, 4 * block_bytes + (4 << 20))))
        y2, ld2 = pl.pallas_call(
            kernel,
            out_shape=out_shapes,
            grid=grid,
            in_specs=[pl.BlockSpec((tb, D), lambda i: (i, 0))],
            out_specs=(pl.BlockSpec((tb, D), lambda i: (i, 0)),
                       pl.BlockSpec((tb, 1), lambda i: (i, 0))),
            compiler_params=pltpu.CompilerParams(
                dimension_semantics=("parallel",),
                vmem_limit_bytes=vmem_limit),
            cost_estimate=cost,
        )(x2)

    y = y2.reshape(orig_shape)
    ld = ld2.reshape(orig_shape[:-1] + (1,))
    return y, ld


# ---------------------------------------------------------------------------
# Example / self-check
# ---------------------------------------------------------------------------
if __name__ == "__main__":
    key = jax.random.PRNGKey(0)
    k1, k2, k3 = jax.random.split(key, 3)

    # ---- direct mode, small [B, D] (grid-less path) ----
    B, D = 8, 32
    x = jax.random.normal(k1, (B, D), jnp.float32)
    u, ld = tanh_flow(x, mode="direct")
    jax.block_until_ready((u, ld))

    u_ref = jnp.tanh(x)
    ld_ref = jnp.sum(jnp.log(1.0 - u_ref ** 2 + 1e-40), axis=-1, keepdims=True)
    assert u.shape == (B, D) and ld.shape == (B, 1)
    assert jnp.allclose(u, u_ref, atol=1e-5, rtol=1e-5)
    assert jnp.allclose(ld, ld_ref, atol=1e-3, rtol=1e-4)

    # ---- inverse mode, small [B, D], inputs strictly inside (-1, 1) ----
    xi = jax.random.uniform(k2, (B, D), jnp.float32, -0.95, 0.95)
    y, ldi = tanh_flow(xi, mode="inverse")
    jax.block_until_ready((y, ldi))

    y_ref = 0.5 * jnp.log((1.0 + xi) / (1.0 - xi))
    ldi_ref = jnp.sum(-jnp.log(1.0 - xi ** 2 + 1e-40), axis=-1, keepdims=True)
    assert jnp.allclose(y, y_ref, atol=1e-4, rtol=1e-4)
    assert jnp.allclose(ldi, ldi_ref, atol=1e-3, rtol=1e-4)

    # ---- gridded path with a ragged last block (forced via threshold=0) ----
    xt = jax.random.normal(k3, (2, 18, 64), jnp.float32)   # flat batch = 36
    ut, ldt = tanh_flow(xt, mode="direct", gridless_max_bytes=0)
    jax.block_until_ready((ut, ldt))

    ut_ref = jnp.tanh(xt)
    ldt_ref = jnp.sum(jnp.log(1.0 - ut_ref ** 2 + 1e-40), axis=-1, keepdims=True)
    assert ut.shape == (2, 18, 64) and ldt.shape == (2, 18, 1)
    assert jnp.allclose(ut, ut_ref, atol=1e-5, rtol=1e-5)
    assert jnp.allclose(ldt, ldt_ref, atol=1e-3, rtol=1e-4)

    print("KERNEL_OK")
</pallas_src>

<mosaic_0001>
module attributes {stable_mosaic.version = 11 : i64} {
  func.func @_tanh_direct_kernel(%arg0: memref<8x32xf32, #tpu.memory_space<vmem>>, %arg1: memref<8x32xf32, #tpu.memory_space<vmem>>, %arg2: memref<8x1xf32, #tpu.memory_space<vmem>>) attributes {dimension_semantics = [], scalar_prefetch = 0 : i64, scratch_operands = 0 : i64, tpu.core_type = #tpu.core_type<tc>} {
    %c0 = arith.constant 0 : index
    %c0_0 = arith.constant 0 : index
    %0 = vector.load %arg0[%c0, %c0_0] : memref<8x32xf32, #tpu.memory_space<vmem>>, vector<8x32xf32>
    %1 = math.tanh %0 : vector<8x32xf32>
    %2 = arith.mulf %1, %1 : vector<8x32xf32>
    %cst = arith.constant 1.000000e+00 : f32
    %3 = vector.broadcast %cst : f32 to vector<8x32xf32>
    %4 = arith.subf %3, %2 : vector<8x32xf32>
    %cst_1 = arith.constant 1.17549435E-38 : f32
    %5 = vector.broadcast %cst_1 : f32 to vector<8x32xf32>
    %6 = arith.addf %4, %5 : vector<8x32xf32>
    %7 = math.log %6 : vector<8x32xf32>
    %cst_2 = arith.constant dense<0.000000e+00> : vector<8xf32>
    %8 = vector.multi_reduction <add>, %7, %cst_2 [1] : vector<8x32xf32> to vector<8xf32>
    %9 = vector.shape_cast %8 : vector<8xf32> to vector<8x1xf32>
    %c0_3 = arith.constant 0 : index
    %c0_4 = arith.constant 0 : index
    %10 = vector.load %arg1[%c0_3, %c0_4] : memref<8x32xf32, #tpu.memory_space<vmem>>, vector<8x32xf32>
    tpu.vector_store %arg1[%c0_3, %c0_4], %1 {strides = array<i32>} : memref<8x32xf32, #tpu.memory_space<vmem>>, vector<8x32xf32>,
    %c0_5 = arith.constant 0 : index
    %c0_6 = arith.constant 0 : index
    %11 = vector.load %arg2[%c0_5, %c0_6] : memref<8x1xf32, #tpu.memory_space<vmem>>, vector<8x1xf32>
    tpu.vector_store %arg2[%c0_5, %c0_6], %9 {strides = array<i32>} : memref<8x1xf32, #tpu.memory_space<vmem>>, vector<8x1xf32>,
    return
  }
}

</mosaic_0001>

<llo_original>
// kernel: tpu_custom_call.1
$region0: #{tpu_custom_call.1}
  #allocation0 [shape = 'u32[]', space=smem, size = 0x4, offset = 0x4, fixed_abs, tag = 'smem constant byte address 0x4 - core index']
  #allocation1 [shape = 'u32[144,128]{1,0:T(1,128)}', space=vmem, size = 0x12000, scoped, tag = 'internal scratch']
  %s0 = inlined_call_operand.hbm [shape: f32[8,32], index: 0, kind: input, shape index: {}]
  %s1 = inlined_call_operand.hbm [shape: f32[8,32], index: 1, kind: output, shape index: {0}]
  %s2 = inlined_call_operand.vmem [shape: f32[8,1], index: 2, kind: output, shape index: {1}]
  %3 = xla_tuple %s1, %s2
  %s4 = sld [smem:[#allocation0]]
  $region26: #{tpu_custom_call.1} parent=0
    _
  %s6 = ssub.s32 1, %s4
  %s7 = scalar_select 0, %s6, %s4
  $region1: #{tpu_custom_call.1} parent=0
    #allocation2 [shape = 'u8[4096]{0}', space=vmem, size = 0x1000, scoped, tag = 'input window, operand 0, single buffered']
    #allocation3 [shape = 's32[1]{0}', space=sflag, size = 0x4, scoped, tag = 'scoped memory for tpu_custom_call.1']
    #allocation4 [shape = 's32[1]{0}', space=sflag, size = 0x4, scoped, tag = 'scoped memory for tpu_custom_call.1']
    #allocation5 [shape = 'u8[4096]{0}', space=vmem, size = 0x1000, scoped, tag = 'output window, operand 0, single buffered']
    %8 = vsyncpa [#allocation3], 0
    %9 = vsyncpa [#allocation4], 0
    // Predicated region
    $region2: #{tpu_custom_call.1} parent=1 // pred_check
      _
    $region3: #{tpu_custom_call.1} parent=1 // pred_check_branch
      %11 = sbr.rel (0) target = $region5
    $region4: #{tpu_custom_call.1} parent=1 // pred_region
      %s13 = ssub.s32 128, 128
      %14 = vsyncadd [#allocation3], %s13
      %s16 = sshll.u32 [#allocation2], 4
      %s17 = int_to_ptr.vmem [resolvable:$true] %s16
      %19 = dma.hbm_to_vmem [thread:$0]  %s0, 128, %s17, [#allocation3]
    $region5: #{tpu_custom_call.1} parent=1 // pred_fallthru
      _
    // Predicated region
    $region6: #{tpu_custom_call.1} parent=1 // pred_check
      _
    $region7: #{tpu_custom_call.1} parent=1 // pred_check_branch
      %21 = sbr.rel (0) target = $region9
    $region8: #{tpu_custom_call.1} parent=1 // pred_region
      %22 = dma.done [#allocation3], 128
    $region9: #{tpu_custom_call.1} parent=1 // pred_fallthru
      _
    %v23 = vld [vmem:[#allocation2] sm:$0xff]
    %v24 = vtanh.pop %v23
    %v25 = vmul.f32 %v24, %v24
    %v26 = vsub.f32 1.0, %v25
    %v27 = vadd.f32 %v26, 1.1754944e-38
    %v28 = vlog2.pop %v27
    %v29 = vmul.f32 %v28, 0.6931472
    %vm30 = vcmask 261120
    %v31 = vsel %vm30, %v29, 0.0
    %32 = vadd.xlane.f32.xlu0 %v31
    %v33 = vpop.xlane.xlu0 %32
    %34 = vst.msk [vmem:[#allocation5] sm:$0xff] %vm30, %v24
    %vm35 = vcmask 7168
    %36 = vst.msk [vmem:[%s2] sm:$0xff] %vm35, %v33
    // Predicated region
    $region10: #{tpu_custom_call.1} parent=1 // pred_check
      _
    $region11: #{tpu_custom_call.1} parent=1 // pred_check_branch
      %38 = sbr.rel (0) target = $region13
    $region12: #{tpu_custom_call.1} parent=1 // pred_region
      %s40 = ssub.s32 128, 128
      %41 = vsyncadd [#allocation4], %s40
      %s43 = sshll.u32 [#allocation5], 4
      %s44 = int_to_ptr.vmem [resolvable:$true] %s43
      %46 = dma.vmem_to_hbm [thread:$0]  %s44, 128, %s1, [#allocation4]
    $region13: #{tpu_custom_call.1} parent=1 // pred_fallthru
      _
    // Predicated region
    $region14: #{tpu_custom_call.1} parent=1 // pred_check
      _
    $region15: #{tpu_custom_call.1} parent=1 // pred_check_branch
      %48 = sbr.rel (0) target = $region17
    $region16: #{tpu_custom_call.1} parent=1 // pred_region
      _
    $region17: #{tpu_custom_call.1} parent=1 // pred_fallthru
      _
    // Predicated region
    $region18: #{tpu_custom_call.1} parent=1 // pred_check
      _
    $region19: #{tpu_custom_call.1} parent=1 // pred_check_branch
      %50 = sbr.rel (0) target = $region21
    $region20: #{tpu_custom_call.1} parent=1 // pred_region
      %51 = dma.done [#allocation4], 128
    $region21: #{tpu_custom_call.1} parent=1 // pred_fallthru
      _
    // Predicated region
    $region22: #{tpu_custom_call.1} parent=1 // pred_check
      _
    $region23: #{tpu_custom_call.1} parent=1 // pred_check_branch
      %53 = sbr.rel (0) target = $region25
    $region24: #{tpu_custom_call.1} parent=1 // pred_region
      _
    $region25: #{tpu_custom_call.1} parent=1 // pred_fallthru
      _
    %54 = vsyncpa [#allocation3], 1
    %55 = vsyncpa [#allocation4], 1

</llo_original>
